<compile_context>
chip_gen: v7x
topology: tpu7x:2x2x1
jax: 0.10.0
libtpu: 0.0.40
codegen_flags: <defaults>
</compile_context>

<pallas_src>
import jax
import jax.numpy as jnp
from jax.experimental import pallas as pl
from jax.experimental.pallas import tpu as pltpu


def _lstm_seq_kernel(x_ref, wih_t_ref, whh_t_ref, bias_ref, wlin_bd_ref, blin_ref, out_ref):
    B, I = x_ref.shape
    H = whh_t_ref.shape[0]
    n_frames = out_ref.shape[1] // I

    # Hoisted, loop-invariant: x @ W_ih^T + (b_ih + b_hh). Gate column order is [i, f, o, g].
    gates_const = (jnp.dot(x_ref[...], wih_t_ref[...], preferred_element_type=jnp.float32)
                   + bias_ref[...])                       # (B, 4H)
    whh_t = whh_t_ref[...]                                # (H, 4H)

    # initHidden: zeros; carried in registers across the unrolled time loop.
    h = jnp.zeros((B, H), jnp.float32)
    c = jnp.zeros((B, H), jnp.float32)

    hs = []
    for t in range(n_frames):                             # static unroll (n_frames small)
        # Only the recurrence lives on the serial critical path.
        gates = gates_const + jnp.dot(h, whh_t, preferred_element_type=jnp.float32)  # (B, 4H)

        sig = jax.nn.sigmoid(gates[:, 0:3 * H])           # one EUP pass over i, f, o
        gi = sig[:, 0:H]
        gf = sig[:, H:2 * H]
        go = sig[:, 2 * H:3 * H]
        gc = jnp.tanh(gates[:, 3 * H:4 * H])              # candidate gate

        c = gf * c + gi * gc
        h = go * jnp.tanh(c)
        hs.append(h)

    # ---- Epilogue (off the critical path): Linear + BatchNorm for all frames at once ----
    # Lane-concat the hidden states: (B, n_frames*H) = (8, 256).
    h_all = jnp.concatenate(hs, axis=1)

    # One MXU matmul against the block-diagonal W_lin^T -> lane-dense (B, n_frames*I).
    y = (jnp.dot(h_all, wlin_bd_ref[...], preferred_element_type=jnp.float32)
         + blin_ref[...])                                 # (B, n_frames*I) = (8, 128)

    # BatchNorm1d(affine=False), training-mode semantics: per-(frame, feature) batch stats
    # over the batch (sublane) axis, biased variance via E[y^2] - E[y]^2, eps = 1e-5.
    mean = jnp.mean(y, axis=0, keepdims=True)             # (1, n_frames*I)
    var = jnp.mean(y * y, axis=0, keepdims=True) - mean * mean
    out_ref[...] = (y - mean) * jax.lax.rsqrt(var + 1e-5)  # single unmasked (8,128) store


def lstm_forward(x, w_ih, b_ih, w_hh, b_hh, w_lin, b_lin, n_frames):
    """x: (B, I); w_ih/w_hh: (4H, I)/(4H, H); w_lin: (I, H). Returns (n_frames, B, I)."""
    B, I = x.shape
    H = w_hh.shape[1]

    def reorder_gates(a):
        # original chunk order along dim 0 is [i, f, g(candidate), o]; reorder to [i, f, o, g]
        gi, gf, gg, go = jnp.split(jnp.asarray(a, jnp.float32), 4, axis=0)
        return jnp.concatenate([gi, gf, go, gg], axis=0)

    # Glue (done once in XLA): reorder gate blocks, pre-transpose weights, fuse + lift
    # biases, and build the block-diagonal linear weight / tiled linear bias.
    wih_t = reorder_gates(w_ih).T                                    # (I, 4H)
    whh_t = reorder_gates(w_hh).T                                    # (H, 4H)
    bias = reorder_gates(jnp.asarray(b_ih, jnp.float32)
                         + jnp.asarray(b_hh, jnp.float32))[None, :]  # (1, 4H)
    wlin_t = jnp.asarray(w_lin, jnp.float32).T                       # (H, I)
    # Block-diagonal W_lin^T: (n_frames*H, n_frames*I); block (t, t) = wlin_t, so one matmul
    # maps the lane-concatenated hidden states to the lane-dense output slab.
    wlin_bd = jnp.kron(jnp.eye(n_frames, dtype=jnp.float32), wlin_t)  # (n_frames*H, n_frames*I)
    blin_rep = jnp.tile(jnp.asarray(b_lin, jnp.float32)[None, :], (1, n_frames))  # (1, n_frames*I)

    vmem = pl.BlockSpec(memory_space=pltpu.MemorySpace.VMEM)

    out_flat = pl.pallas_call(
        _lstm_seq_kernel,
        out_shape=jax.ShapeDtypeStruct((B, n_frames * I), jnp.float32),  # lane-dense (8,128)
        in_specs=[vmem] * 6,
        out_specs=vmem,
    )(jnp.asarray(x, jnp.float32), wih_t, whh_t, bias, wlin_bd, blin_rep)

    # (B, n_frames*I) -> (n_frames, B, I)
    return out_flat.reshape(B, n_frames, I).transpose(1, 0, 2)


def _xavier_uniform(key, shape):
    fan_out, fan_in = shape
    bound = jnp.sqrt(6.0 / (fan_in + fan_out))
    return jax.random.uniform(key, shape, jnp.float32, -bound, bound)


def _reference(x, w_ih, b_ih, w_hh, b_hh, w_lin, b_lin, n_frames):
    B = x.shape[0]
    H = w_hh.shape[1]
    h = jnp.zeros((B, H), jnp.float32)
    c = jnp.zeros((B, H), jnp.float32)
    outs = []
    for _ in range(n_frames):
        gates = x @ w_ih.T + b_ih + h @ w_hh.T + b_hh
        gi, gf, gc, go = jnp.split(gates, 4, axis=1)
        gi, gf, gc, go = jax.nn.sigmoid(gi), jax.nn.sigmoid(gf), jnp.tanh(gc), jax.nn.sigmoid(go)
        c = gf * c + gi * gc
        h = go * jnp.tanh(c)
        y = h @ w_lin.T + b_lin
        m = y.mean(0, keepdims=True)
        v = ((y - m) ** 2).mean(0, keepdims=True)
        outs.append((y - m) / jnp.sqrt(v + 1e-5))
    return jnp.stack(outs, 0)


if __name__ == "__main__":
    batch_size, input_size, hidden_size, n_frames = 8, 16, 32, 8

    key = jax.random.PRNGKey(0)
    k_x, k_wih, k_whh, k_wlin = jax.random.split(key, 4)

    # Deterministic parameter init matching LSTM.initWeight(init_forget_bias=1):
    # xavier_uniform_ weights; biases zero except the forget-gate slices (= 1.0).
    w_ih = _xavier_uniform(k_wih, (4 * hidden_size, input_size))
    w_hh = _xavier_uniform(k_whh, (4 * hidden_size, hidden_size))
    w_lin = _xavier_uniform(k_wlin, (input_size, hidden_size))
    b_ih = jnp.zeros((4 * hidden_size,), jnp.float32).at[hidden_size:2 * hidden_size].set(1.0)
    b_hh = jnp.zeros((4 * hidden_size,), jnp.float32).at[hidden_size:2 * hidden_size].set(1.0)
    b_lin = jnp.zeros((input_size,), jnp.float32)

    x = jax.random.normal(k_x, (batch_size, input_size), jnp.float32)

    out = lstm_forward(x, w_ih, b_ih, w_hh, b_hh, w_lin, b_lin, n_frames)
    out = jax.block_until_ready(out)

    ref = _reference(x, w_ih, b_ih, w_hh, b_hh, w_lin, b_lin, n_frames)
    assert out.shape == (n_frames, batch_size, input_size)
    assert jnp.allclose(out, ref, atol=1e-4, rtol=1e-4)

    print("KERNEL_OK")
</pallas_src>

<mosaic_0001>
module attributes {stable_mosaic.version = 11 : i64} {
  func.func @_lstm_seq_kernel(%arg0: memref<8x16xf32, #tpu.memory_space<vmem>>, %arg1: memref<16x128xf32, #tpu.memory_space<vmem>>, %arg2: memref<32x128xf32, #tpu.memory_space<vmem>>, %arg3: memref<1x128xf32, #tpu.memory_space<vmem>>, %arg4: memref<256x128xf32, #tpu.memory_space<vmem>>, %arg5: memref<1x128xf32, #tpu.memory_space<vmem>>, %arg6: memref<8x128xf32, #tpu.memory_space<vmem>>) attributes {dimension_semantics = [], scalar_prefetch = 0 : i64, scratch_operands = 0 : i64, tpu.core_type = #tpu.core_type<tc>} {
    %c0 = arith.constant 0 : index
    %c0_0 = arith.constant 0 : index
    %0 = vector.load %arg0[%c0, %c0_0] : memref<8x16xf32, #tpu.memory_space<vmem>>, vector<8x16xf32>
    %c0_1 = arith.constant 0 : index
    %c0_2 = arith.constant 0 : index
    %1 = vector.load %arg1[%c0_1, %c0_2] : memref<16x128xf32, #tpu.memory_space<vmem>>, vector<16x128xf32>
    %cst = arith.constant dense<0.000000e+00> : vector<8x128xf32>
    %2 = tpu.matmul %0, %1, %cst {dimension_numbers = #tpu.dot_dimension_numbers<[1], [0], [0], [1], [0, 0, 1, 1], [], []>} : vector<8x16xf32>, vector<16x128xf32>, vector<8x128xf32> -> vector<8x128xf32>
    %c0_3 = arith.constant 0 : index
    %c0_4 = arith.constant 0 : index
    %3 = vector.load %arg3[%c0_3, %c0_4] : memref<1x128xf32, #tpu.memory_space<vmem>>, vector<1x128xf32>
    %4 = vector.broadcast %3 : vector<1x128xf32> to vector<8x128xf32>
    %5 = arith.addf %2, %4 : vector<8x128xf32>
    %c0_5 = arith.constant 0 : index
    %c0_6 = arith.constant 0 : index
    %6 = vector.load %arg2[%c0_5, %c0_6] : memref<32x128xf32, #tpu.memory_space<vmem>>, vector<32x128xf32>
    %cst_7 = arith.constant 0.000000e+00 : f32
    %7 = vector.broadcast %cst_7 : f32 to vector<8x32xf32>
    %cst_8 = arith.constant 0.000000e+00 : f32
    %8 = vector.broadcast %cst_8 : f32 to vector<8x32xf32>
    %cst_9 = arith.constant dense<0.000000e+00> : vector<8x128xf32>
    %9 = tpu.matmul %7, %6, %cst_9 {dimension_numbers = #tpu.dot_dimension_numbers<[1], [0], [0], [1], [0, 0, 1, 1], [], []>} : vector<8x32xf32>, vector<32x128xf32>, vector<8x128xf32> -> vector<8x128xf32>
    %10 = arith.addf %5, %9 : vector<8x128xf32>
    %11 = vector.extract_strided_slice %10 {offsets = [0, 0], sizes = [8, 96], strides = [1, 1]} : vector<8x128xf32> to vector<8x96xf32>
    %12 = arith.negf %11 : vector<8x96xf32>
    %13 = math.exp %12 : vector<8x96xf32>
    %cst_10 = arith.constant 1.000000e+00 : f32
    %14 = vector.broadcast %cst_10 : f32 to vector<8x96xf32>
    %15 = arith.addf %14, %13 : vector<8x96xf32>
    %16 = arith.divf %14, %15 : vector<8x96xf32>
    %17 = vector.extract_strided_slice %16 {offsets = [0, 0], sizes = [8, 32], strides = [1, 1]} : vector<8x96xf32> to vector<8x32xf32>
    %18 = vector.extract_strided_slice %16 {offsets = [0, 32], sizes = [8, 32], strides = [1, 1]} : vector<8x96xf32> to vector<8x32xf32>
    %19 = vector.extract_strided_slice %16 {offsets = [0, 64], sizes = [8, 32], strides = [1, 1]} : vector<8x96xf32> to vector<8x32xf32>
    %20 = vector.extract_strided_slice %10 {offsets = [0, 96], sizes = [8, 32], strides = [1, 1]} : vector<8x128xf32> to vector<8x32xf32>
    %21 = math.tanh %20 : vector<8x32xf32>
    %22 = arith.mulf %18, %8 : vector<8x32xf32>
    %23 = arith.mulf %17, %21 : vector<8x32xf32>
    %24 = arith.addf %22, %23 : vector<8x32xf32>
    %25 = math.tanh %24 : vector<8x32xf32>
    %26 = arith.mulf %19, %25 : vector<8x32xf32>
    %cst_11 = arith.constant dense<0.000000e+00> : vector<8x128xf32>
    %27 = tpu.matmul %26, %6, %cst_11 {dimension_numbers = #tpu.dot_dimension_numbers<[1], [0], [0], [1], [0, 0, 1, 1], [], []>} : vector<8x32xf32>, vector<32x128xf32>, vector<8x128xf32> -> vector<8x128xf32>
    %28 = arith.addf %5, %27 : vector<8x128xf32>
    %29 = vector.extract_strided_slice %28 {offsets = [0, 0], sizes = [8, 96], strides = [1, 1]} : vector<8x128xf32> to vector<8x96xf32>
    %30 = arith.negf %29 : vector<8x96xf32>
    %31 = math.exp %30 : vector<8x96xf32>
    %cst_12 = arith.constant 1.000000e+00 : f32
    %32 = vector.broadcast %cst_12 : f32 to vector<8x96xf32>
    %33 = arith.addf %32, %31 : vector<8x96xf32>
    %34 = arith.divf %32, %33 : vector<8x96xf32>
    %35 = vector.extract_strided_slice %34 {offsets = [0, 0], sizes = [8, 32], strides = [1, 1]} : vector<8x96xf32> to vector<8x32xf32>
    %36 = vector.extract_strided_slice %34 {offsets = [0, 32], sizes = [8, 32], strides = [1, 1]} : vector<8x96xf32> to vector<8x32xf32>
    %37 = vector.extract_strided_slice %34 {offsets = [0, 64], sizes = [8, 32], strides = [1, 1]} : vector<8x96xf32> to vector<8x32xf32>
    %38 = vector.extract_strided_slice %28 {offsets = [0, 96], sizes = [8, 32], strides = [1, 1]} : vector<8x128xf32> to vector<8x32xf32>
    %39 = math.tanh %38 : vector<8x32xf32>
    %40 = arith.mulf %36, %24 : vector<8x32xf32>
    %41 = arith.mulf %35, %39 : vector<8x32xf32>
    %42 = arith.addf %40, %41 : vector<8x32xf32>
    %43 = math.tanh %42 : vector<8x32xf32>
    %44 = arith.mulf %37, %43 : vector<8x32xf32>
    %cst_13 = arith.constant dense<0.000000e+00> : vector<8x128xf32>
    %45 = tpu.matmul %44, %6, %cst_13 {dimension_numbers = #tpu.dot_dimension_numbers<[1], [0], [0], [1], [0, 0, 1, 1], [], []>} : vector<8x32xf32>, vector<32x128xf32>, vector<8x128xf32> -> vector<8x128xf32>
    %46 = arith.addf %5, %45 : vector<8x128xf32>
    %47 = vector.extract_strided_slice %46 {offsets = [0, 0], sizes = [8, 96], strides = [1, 1]} : vector<8x128xf32> to vector<8x96xf32>
    %48 = arith.negf %47 : vector<8x96xf32>
    %49 = math.exp %48 : vector<8x96xf32>
    %cst_14 = arith.constant 1.000000e+00 : f32
    %50 = vector.broadcast %cst_14 : f32 to vector<8x96xf32>
    %51 = arith.addf %50, %49 : vector<8x96xf32>
    %52 = arith.divf %50, %51 : vector<8x96xf32>
    %53 = vector.extract_strided_slice %52 {offsets = [0, 0], sizes = [8, 32], strides = [1, 1]} : vector<8x96xf32> to vector<8x32xf32>
    %54 = vector.extract_strided_slice %52 {offsets = [0, 32], sizes = [8, 32], strides = [1, 1]} : vector<8x96xf32> to vector<8x32xf32>
    %55 = vector.extract_strided_slice %52 {offsets = [0, 64], sizes = [8, 32], strides = [1, 1]} : vector<8x96xf32> to vector<8x32xf32>
    %56 = vector.extract_strided_slice %46 {offsets = [0, 96], sizes = [8, 32], strides = [1, 1]} : vector<8x128xf32> to vector<8x32xf32>
    %57 = math.tanh %56 : vector<8x32xf32>
    %58 = arith.mulf %54, %42 : vector<8x32xf32>
    %59 = arith.mulf %53, %57 : vector<8x32xf32>
    %60 = arith.addf %58, %59 : vector<8x32xf32>
    %61 = math.tanh %60 : vector<8x32xf32>
    %62 = arith.mulf %55, %61 : vector<8x32xf32>
    %cst_15 = arith.constant dense<0.000000e+00> : vector<8x128xf32>
    %63 = tpu.matmul %62, %6, %cst_15 {dimension_numbers = #tpu.dot_dimension_numbers<[1], [0], [0], [1], [0, 0, 1, 1], [], []>} : vector<8x32xf32>, vector<32x128xf32>, vector<8x128xf32> -> vector<8x128xf32>
    %64 = arith.addf %5, %63 : vector<8x128xf32>
    %65 = vector.extract_strided_slice %64 {offsets = [0, 0], sizes = [8, 96], strides = [1, 1]} : vector<8x128xf32> to vector<8x96xf32>
    %66 = arith.negf %65 : vector<8x96xf32>
    %67 = math.exp %66 : vector<8x96xf32>
    %cst_16 = arith.constant 1.000000e+00 : f32
    %68 = vector.broadcast %cst_16 : f32 to vector<8x96xf32>
    %69 = arith.addf %68, %67 : vector<8x96xf32>
    %70 = arith.divf %68, %69 : vector<8x96xf32>
    %71 = vector.extract_strided_slice %70 {offsets = [0, 0], sizes = [8, 32], strides = [1, 1]} : vector<8x96xf32> to vector<8x32xf32>
    %72 = vector.extract_strided_slice %70 {offsets = [0, 32], sizes = [8, 32], strides = [1, 1]} : vector<8x96xf32> to vector<8x32xf32>
    %73 = vector.extract_strided_slice %70 {offsets = [0, 64], sizes = [8, 32], strides = [1, 1]} : vector<8x96xf32> to vector<8x32xf32>
    %74 = vector.extract_strided_slice %64 {offsets = [0, 96], sizes = [8, 32], strides = [1, 1]} : vector<8x128xf32> to vector<8x32xf32>
    %75 = math.tanh %74 : vector<8x32xf32>
    %76 = arith.mulf %72, %60 : vector<8x32xf32>
    %77 = arith.mulf %71, %75 : vector<8x32xf32>
    %78 = arith.addf %76, %77 : vector<8x32xf32>
    %79 = math.tanh %78 : vector<8x32xf32>
    %80 = arith.mulf %73, %79 : vector<8x32xf32>
    %cst_17 = arith.constant dense<0.000000e+00> : vector<8x128xf32>
    %81 = tpu.matmul %80, %6, %cst_17 {dimension_numbers = #tpu.dot_dimension_numbers<[1], [0], [0], [1], [0, 0, 1, 1], [], []>} : vector<8x32xf32>, vector<32x128xf32>, vector<8x128xf32> -> vector<8x128xf32>
    %82 = arith.addf %5, %81 : vector<8x128xf32>
    %83 = vector.extract_strided_slice %82 {offsets = [0, 0], sizes = [8, 96], strides = [1, 1]} : vector<8x128xf32> to vector<8x96xf32>
    %84 = arith.negf %83 : vector<8x96xf32>
    %85 = math.exp %84 : vector<8x96xf32>
    %cst_18 = arith.constant 1.000000e+00 : f32
    %86 = vector.broadcast %cst_18 : f32 to vector<8x96xf32>
    %87 = arith.addf %86, %85 : vector<8x96xf32>
    %88 = arith.divf %86, %87 : vector<8x96xf32>
    %89 = vector.extract_strided_slice %88 {offsets = [0, 0], sizes = [8, 32], strides = [1, 1]} : vector<8x96xf32> to vector<8x32xf32>
    %90 = vector.extract_strided_slice %88 {offsets = [0, 32], sizes = [8, 32], strides = [1, 1]} : vector<8x96xf32> to vector<8x32xf32>
    %91 = vector.extract_strided_slice %88 {offsets = [0, 64], sizes = [8, 32], strides = [1, 1]} : vector<8x96xf32> to vector<8x32xf32>
    %92 = vector.extract_strided_slice %82 {offsets = [0, 96], sizes = [8, 32], strides = [1, 1]} : vector<8x128xf32> to vector<8x32xf32>
    %93 = math.tanh %92 : vector<8x32xf32>
    %94 = arith.mulf %90, %78 : vector<8x32xf32>
    %95 = arith.mulf %89, %93 : vector<8x32xf32>
    %96 = arith.addf %94, %95 : vector<8x32xf32>
    %97 = math.tanh %96 : vector<8x32xf32>
    %98 = arith.mulf %91, %97 : vector<8x32xf32>
    %cst_19 = arith.constant dense<0.000000e+00> : vector<8x128xf32>
    %99 = tpu.matmul %98, %6, %cst_19 {dimension_numbers = #tpu.dot_dimension_numbers<[1], [0], [0], [1], [0, 0, 1, 1], [], []>} : vector<8x32xf32>, vector<32x128xf32>, vector<8x128xf32> -> vector<8x128xf32>
    %100 = arith.addf %5, %99 : vector<8x128xf32>
    %101 = vector.extract_strided_slice %100 {offsets = [0, 0], sizes = [8, 96], strides = [1, 1]} : vector<8x128xf32> to vector<8x96xf32>
    %102 = arith.negf %101 : vector<8x96xf32>
    %103 = math.exp %102 : vector<8x96xf32>
    %cst_20 = arith.constant 1.000000e+00 : f32
    %104 = vector.broadcast %cst_20 : f32 to vector<8x96xf32>
    %105 = arith.addf %104, %103 : vector<8x96xf32>
    %106 = arith.divf %104, %105 : vector<8x96xf32>
    %107 = vector.extract_strided_slice %106 {offsets = [0, 0], sizes = [8, 32], strides = [1, 1]} : vector<8x96xf32> to vector<8x32xf32>
    %108 = vector.extract_strided_slice %106 {offsets = [0, 32], sizes = [8, 32], strides = [1, 1]} : vector<8x96xf32> to vector<8x32xf32>
    %109 = vector.extract_strided_slice %106 {offsets = [0, 64], sizes = [8, 32], strides = [1, 1]} : vector<8x96xf32> to vector<8x32xf32>
    %110 = vector.extract_strided_slice %100 {offsets = [0, 96], sizes = [8, 32], strides = [1, 1]} : vector<8x128xf32> to vector<8x32xf32>
    %111 = math.tanh %110 : vector<8x32xf32>
    %112 = arith.mulf %108, %96 : vector<8x32xf32>
    %113 = arith.mulf %107, %111 : vector<8x32xf32>
    %114 = arith.addf %112, %113 : vector<8x32xf32>
    %115 = math.tanh %114 : vector<8x32xf32>
    %116 = arith.mulf %109, %115 : vector<8x32xf32>
    %cst_21 = arith.constant dense<0.000000e+00> : vector<8x128xf32>
    %117 = tpu.matmul %116, %6, %cst_21 {dimension_numbers = #tpu.dot_dimension_numbers<[1], [0], [0], [1], [0, 0, 1, 1], [], []>} : vector<8x32xf32>, vector<32x128xf32>, vector<8x128xf32> -> vector<8x128xf32>
    %118 = arith.addf %5, %117 : vector<8x128xf32>
    %119 = vector.extract_strided_slice %118 {offsets = [0, 0], sizes = [8, 96], strides = [1, 1]} : vector<8x128xf32> to vector<8x96xf32>
    %120 = arith.negf %119 : vector<8x96xf32>
    %121 = math.exp %120 : vector<8x96xf32>
    %cst_22 = arith.constant 1.000000e+00 : f32
    %122 = vector.broadcast %cst_22 : f32 to vector<8x96xf32>
    %123 = arith.addf %122, %121 : vector<8x96xf32>
    %124 = arith.divf %122, %123 : vector<8x96xf32>
    %125 = vector.extract_strided_slice %124 {offsets = [0, 0], sizes = [8, 32], strides = [1, 1]} : vector<8x96xf32> to vector<8x32xf32>
    %126 = vector.extract_strided_slice %124 {offsets = [0, 32], sizes = [8, 32], strides = [1, 1]} : vector<8x96xf32> to vector<8x32xf32>
    %127 = vector.extract_strided_slice %124 {offsets = [0, 64], sizes = [8, 32], strides = [1, 1]} : vector<8x96xf32> to vector<8x32xf32>
    %128 = vector.extract_strided_slice %118 {offsets = [0, 96], sizes = [8, 32], strides = [1, 1]} : vector<8x128xf32> to vector<8x32xf32>
    %129 = math.tanh %128 : vector<8x32xf32>
    %130 = arith.mulf %126, %114 : vector<8x32xf32>
    %131 = arith.mulf %125, %129 : vector<8x32xf32>
    %132 = arith.addf %130, %131 : vector<8x32xf32>
    %133 = math.tanh %132 : vector<8x32xf32>
    %134 = arith.mulf %127, %133 : vector<8x32xf32>
    %cst_23 = arith.constant dense<0.000000e+00> : vector<8x128xf32>
    %135 = tpu.matmul %134, %6, %cst_23 {dimension_numbers = #tpu.dot_dimension_numbers<[1], [0], [0], [1], [0, 0, 1, 1], [], []>} : vector<8x32xf32>, vector<32x128xf32>, vector<8x128xf32> -> vector<8x128xf32>
    %136 = arith.addf %5, %135 : vector<8x128xf32>
    %137 = vector.extract_strided_slice %136 {offsets = [0, 0], sizes = [8, 96], strides = [1, 1]} : vector<8x128xf32> to vector<8x96xf32>
    %138 = arith.negf %137 : vector<8x96xf32>
    %139 = math.exp %138 : vector<8x96xf32>
    %cst_24 = arith.constant 1.000000e+00 : f32
    %140 = vector.broadcast %cst_24 : f32 to vector<8x96xf32>
    %141 = arith.addf %140, %139 : vector<8x96xf32>
    %142 = arith.divf %140, %141 : vector<8x96xf32>
    %143 = vector.extract_strided_slice %142 {offsets = [0, 0], sizes = [8, 32], strides = [1, 1]} : vector<8x96xf32> to vector<8x32xf32>
    %144 = vector.extract_strided_slice %142 {offsets = [0, 32], sizes = [8, 32], strides = [1, 1]} : vector<8x96xf32> to vector<8x32xf32>
    %145 = vector.extract_strided_slice %142 {offsets = [0, 64], sizes = [8, 32], strides = [1, 1]} : vector<8x96xf32> to vector<8x32xf32>
    %146 = vector.extract_strided_slice %136 {offsets = [0, 96], sizes = [8, 32], strides = [1, 1]} : vector<8x128xf32> to vector<8x32xf32>
    %147 = math.tanh %146 : vector<8x32xf32>
    %148 = arith.mulf %144, %132 : vector<8x32xf32>
    %149 = arith.mulf %143, %147 : vector<8x32xf32>
    %150 = arith.addf %148, %149 : vector<8x32xf32>
    %151 = math.tanh %150 : vector<8x32xf32>
    %152 = arith.mulf %145, %151 : vector<8x32xf32>
    %153 = tpu.concatenate %26, %44, %62, %80, %98, %116, %134, %152 in 1 : vector<8x32xf32>, vector<8x32xf32>, vector<8x32xf32>, vector<8x32xf32>, vector<8x32xf32>, vector<8x32xf32>, vector<8x32xf32>, vector<8x32xf32> -> vector<8x256xf32>
    %c0_25 = arith.constant 0 : index
    %c0_26 = arith.constant 0 : index
    %154 = vector.load %arg4[%c0_25, %c0_26] : memref<256x128xf32, #tpu.memory_space<vmem>>, vector<256x128xf32>
    %cst_27 = arith.constant dense<0.000000e+00> : vector<8x128xf32>
    %155 = tpu.matmul %153, %154, %cst_27 {dimension_numbers = #tpu.dot_dimension_numbers<[1], [0], [0], [1], [0, 0, 1, 1], [], []>} : vector<8x256xf32>, vector<256x128xf32>, vector<8x128xf32> -> vector<8x128xf32>
    %c0_28 = arith.constant 0 : index
    %c0_29 = arith.constant 0 : index
    %156 = vector.load %arg5[%c0_28, %c0_29] : memref<1x128xf32, #tpu.memory_space<vmem>>, vector<1x128xf32>
    %157 = vector.broadcast %156 : vector<1x128xf32> to vector<8x128xf32>
    %158 = arith.addf %155, %157 : vector<8x128xf32>
    %cst_30 = arith.constant dense<0.000000e+00> : vector<128xf32>
    %159 = vector.multi_reduction <add>, %158, %cst_30 [0] : vector<8x128xf32> to vector<128xf32>
    %160 = vector.shape_cast %159 : vector<128xf32> to vector<1x128xf32>
    %cst_31 = arith.constant 8.000000e+00 : f32
    %161 = vector.broadcast %cst_31 : f32 to vector<1x128xf32>
    %162 = arith.divf %160, %161 : vector<1x128xf32>
    %163 = arith.mulf %158, %158 : vector<8x128xf32>
    %cst_32 = arith.constant dense<0.000000e+00> : vector<128xf32>
    %164 = vector.multi_reduction <add>, %163, %cst_32 [0] : vector<8x128xf32> to vector<128xf32>
    %165 = vector.shape_cast %164 : vector<128xf32> to vector<1x128xf32>
    %cst_33 = arith.constant 8.000000e+00 : f32
    %166 = vector.broadcast %cst_33 : f32 to vector<1x128xf32>
    %167 = arith.divf %165, %166 : vector<1x128xf32>
    %168 = arith.mulf %162, %162 : vector<1x128xf32>
    %169 = arith.subf %167, %168 : vector<1x128xf32>
    %170 = vector.broadcast %162 : vector<1x128xf32> to vector<8x128xf32>
    %171 = arith.subf %158, %170 : vector<8x128xf32>
    %cst_34 = arith.constant 9.99999974E-6 : f32
    %172 = vector.broadcast %cst_34 : f32 to vector<1x128xf32>
    %173 = arith.addf %169, %172 : vector<1x128xf32>
    %174 = math.rsqrt %173 : vector<1x128xf32>
    %175 = vector.broadcast %174 : vector<1x128xf32> to vector<8x128xf32>
    %176 = arith.mulf %171, %175 : vector<8x128xf32>
    %c0_35 = arith.constant 0 : index
    %c0_36 = arith.constant 0 : index
    %177 = vector.load %arg6[%c0_35, %c0_36] : memref<8x128xf32, #tpu.memory_space<vmem>>, vector<8x128xf32>
    tpu.vector_store %arg6[%c0_35, %c0_36], %176 {strides = array<i32>} : memref<8x128xf32, #tpu.memory_space<vmem>>, vector<8x128xf32>,
    return
  }
}

</mosaic_0001>

<llo_original>
// kernel: tpu_custom_call.1
$region0: #{tpu_custom_call.1}
  #allocation0 [shape = 'u32[]', space=smem, size = 0x4, offset = 0x4, fixed_abs, tag = 'smem constant byte address 0x4 - core index']
  #allocation1 [shape = 'u32[144,128]{1,0:T(1,128)}', space=vmem, size = 0x12000, scoped, tag = 'internal scratch']
  %s0 = inlined_call_operand.hbm [shape: f32[8,16], index: 0, kind: input, shape index: {}]
  %s1 = inlined_call_operand.hbm [shape: f32[16,128], index: 1, kind: input, shape index: {}]
  %s2 = inlined_call_operand.hbm [shape: f32[32,128], index: 2, kind: input, shape index: {}]
  %s3 = inlined_call_operand.vmem [shape: f32[1,128], index: 3, kind: input, shape index: {}]
  %s4 = inlined_call_operand.hbm [shape: f32[256,128], index: 4, kind: input, shape index: {}]
  %s5 = inlined_call_operand.vmem [shape: f32[1,128], index: 5, kind: input, shape index: {}]
  %s6 = inlined_call_operand.hbm [shape: f32[8,128], index: 6, kind: output, shape index: {}]
  %s7 = sld [smem:[#allocation0]]
  $region50: #{tpu_custom_call.1} parent=0
    _
  %s9 = ssub.s32 1, %s7
  %s10 = scalar_select 0, %s9, %s7
  $region1: #{tpu_custom_call.1} parent=0
    #allocation2 [shape = 'u8[4096]{0}', space=vmem, size = 0x1000, scoped, tag = 'input window, operand 0, single buffered']
    #allocation3 [shape = 's32[1]{0}', space=sflag, size = 0x4, scoped, tag = 'scoped memory for tpu_custom_call.1']
    #allocation4 [shape = 's32[1]{0}', space=sflag, size = 0x4, scoped, tag = 'scoped memory for tpu_custom_call.1']
    #allocation5 [shape = 'u8[8192]{0}', space=vmem, size = 0x2000, scoped, tag = 'input window, operand 1, single buffered']
    #allocation6 [shape = 's32[1]{0}', space=sflag, size = 0x4, scoped, tag = 'scoped memory for tpu_custom_call.1']
    #allocation7 [shape = 'u8[16384]{0}', space=vmem, size = 0x4000, scoped, tag = 'input window, operand 2, single buffered']
    #allocation8 [shape = 'u8[131072]{0}', space=vmem, size = 0x20000, scoped, tag = 'input window, operand 4, single buffered']
    #allocation9 [shape = 's32[1]{0}', space=sflag, size = 0x4, scoped, tag = 'scoped memory for tpu_custom_call.1']
    #allocation10 [shape = 'u8[4096]{0}', space=vmem, size = 0x1000, scoped, tag = 'output window, operand 0, single buffered']
    %11 = vsyncpa [#allocation3], 0
    %12 = vsyncpa [#allocation6], 0
    %13 = vsyncpa [#allocation9], 0
    %14 = vsyncpa [#allocation4], 0
    // Predicated region
    $region2: #{tpu_custom_call.1} parent=1 // pred_check
      _
    $region3: #{tpu_custom_call.1} parent=1 // pred_check_branch
      %16 = sbr.rel (0) target = $region5
    $region4: #{tpu_custom_call.1} parent=1 // pred_region
      %s18 = ssub.s32 128, 128
      %19 = vsyncadd [#allocation3], %s18
      %s21 = sshll.u32 [#allocation2], 4
      %s22 = int_to_ptr.vmem [resolvable:$true] %s21
      %24 = dma.hbm_to_vmem [thread:$0]  %s0, 128, %s22, [#allocation3]
    $region5: #{tpu_custom_call.1} parent=1 // pred_fallthru
      _
    // Predicated region
    $region6: #{tpu_custom_call.1} parent=1 // pred_check
      _
    $region7: #{tpu_custom_call.1} parent=1 // pred_check_branch
      %26 = sbr.rel (0) target = $region9
    $region8: #{tpu_custom_call.1} parent=1 // pred_region
      %s28 = ssub.s32 256, 256
      %29 = vsyncadd [#allocation6], %s28
      %s30 = sshll.u32 [#allocation5], 4
      %s31 = int_to_ptr.vmem [resolvable:$true] %s30
      %36 = dma.hbm_to_vmem [thread:$0]  %s1, 256, %s31, [#allocation6], 128, 128, 8
    $region9: #{tpu_custom_call.1} parent=1 // pred_fallthru
      _
    // Predicated region
    $region10: #{tpu_custom_call.1} parent=1 // pred_check
      _
    $region11: #{tpu_custom_call.1} parent=1 // pred_check_branch
      %38 = sbr.rel (0) target = $region13
    $region12: #{tpu_custom_call.1} parent=1 // pred_region
      %s40 = ssub.s32 512, 512
      %41 = vsyncadd [#allocation6], %s40
      %s42 = sshll.u32 [#allocation7], 4
      %s43 = int_to_ptr.vmem [resolvable:$true] %s42
      %48 = dma.hbm_to_vmem [thread:$0]  %s2, 512, %s43, [#allocation6], 128, 128, 8
    $region13: #{tpu_custom_call.1} parent=1 // pred_fallthru
      _
    // Predicated region
    $region14: #{tpu_custom_call.1} parent=1 // pred_check
      _
    $region15: #{tpu_custom_call.1} parent=1 // pred_check_branch
      %50 = sbr.rel (0) target = $region17
    $region16: #{tpu_custom_call.1} parent=1 // pred_region
      _
    $region17: #{tpu_custom_call.1} parent=1 // pred_fallthru
      _
    // Predicated region
    $region18: #{tpu_custom_call.1} parent=1 // pred_check
      _
    $region19: #{tpu_custom_call.1} parent=1 // pred_check_branch
      %52 = sbr.rel (0) target = $region21
    $region20: #{tpu_custom_call.1} parent=1 // pred_region
      %s54 = ssub.s32 4096, 4096
      %55 = vsyncadd [#allocation9], %s54
      %s56 = sshll.u32 [#allocation8], 4
      %s57 = int_to_ptr.vmem [resolvable:$true] %s56
      %62 = dma.hbm_to_vmem [thread:$0]  %s4, 4096, %s57, [#allocation9], 128, 128, 8
    $region21: #{tpu_custom_call.1} parent=1 // pred_fallthru
      _
    // Predicated region
    $region22: #{tpu_custom_call.1} parent=1 // pred_check
      _
    $region23: #{tpu_custom_call.1} parent=1 // pred_check_branch
      %64 = sbr.rel (0) target = $region25
    $region24: #{tpu_custom_call.1} parent=1 // pred_region
      _
    $region25: #{tpu_custom_call.1} parent=1 // pred_fallthru
      _
    // Predicated region
    $region26: #{tpu_custom_call.1} parent=1 // pred_check
      _
    $region27: #{tpu_custom_call.1} parent=1 // pred_check_branch
      %66 = sbr.rel (0) target = $region29
    $region28: #{tpu_custom_call.1} parent=1 // pred_region
      %67 = dma.done [#allocation3], 128
    $region29: #{tpu_custom_call.1} parent=1 // pred_fallthru
      _
    // Predicated region
    $region30: #{tpu_custom_call.1} parent=1 // pred_check
      _
    $region31: #{tpu_custom_call.1} parent=1 // pred_check_branch
      %69 = sbr.rel (0) target = $region33
    $region32: #{tpu_custom_call.1} parent=1 // pred_region
      %70 = dma.done [#allocation6], 256
    $region33: #{tpu_custom_call.1} parent=1 // pred_fallthru
      _
    // Predicated region
    $region34: #{tpu_custom_call.1} parent=1 // pred_check
      _
    $region35: #{tpu_custom_call.1} parent=1 // pred_check_branch
      %72 = sbr.rel (0) target = $region37
    $region36: #{tpu_custom_call.1} parent=1 // pred_region
      %73 = dma.done [#allocation6], 512
    $region37: #{tpu_custom_call.1} parent=1 // pred_fallthru
      _
    // Predicated region
    $region38: #{tpu_custom_call.1} parent=1 // pred_check
      _
    $region39: #{tpu_custom_call.1} parent=1 // pred_check_branch
      %75 = sbr.rel (0) target = $region41
    $region40: #{tpu_custom_call.1} parent=1 // pred_region
      %76 = dma.done [#allocation9], 4096
    $region41: #{tpu_custom_call.1} parent=1 // pred_fallthru
      _
    %v77 = vld [vmem:[#allocation2] sm:$0xff]
    %v78 = vld [vmem:[#allocation5] sm:$0xff]
    %v79 = vld [vmem:[#allocation5 + $0x8] sm:$0xff]
    %v80 = vld [vmem:[%s3] sm:$0x1]
    %v82 = vlaneseq
    %v83 = vshrl.u32 %v82, 7
    %v84 = vsub.s32 0, %v83
    %v85 = vrot.slane %v80, %v84
    %vm87 = vcmask 130048
    %v89 = vsel %vm87, %v77, 0
    %91 = vmatprep.subr.mxu0 0.0
    %92 = vmatpush1.msra.mxu0 %v78
    %93 = vmatprep.subr.mxu0 0.0
    %94 = vmatpush1.msra.mxu0 %v79
    %95 = vmatprep.subr.mxu0 0.0
    %96 = vmatpush1.msra.mxu0 0.0
    %97 = vmatprep.subr.mxu0 0.0
    %98 = vmatpush1.msra.mxu0 0.0
    %99 = vmatprep.subr.mxu0 0.0
    %100 = vmatpush1.msra.mxu0 0.0
    %101 = vmatprep.subr.mxu0 0.0
    %102 = vmatpush1.msra.mxu0 0.0
    %103 = vmatprep.subr.mxu0 0.0
    %104 = vmatpush1.msra.mxu0 0.0
    %105 = vmatprep.subr.mxu0 0.0
    %106 = vmatpush1.msra.mxu0 0.0
    %107 = vmatprep.subr.mxu0 0.0
    %108 = vmatpush1.msra.mxu0 0.0
    %109 = vmatprep.subr.mxu0 0.0
    %110 = vmatpush1.msra.mxu0 0.0
    %111 = vmatprep.subr.mxu0 0.0
    %112 = vmatpush1.msra.mxu0 0.0
    %113 = vmatprep.subr.mxu0 0.0
    %114 = vmatpush1.msra.mxu0 0.0
    %115 = vmatprep.subr.mxu0 0.0
    %116 = vmatpush1.msra.mxu0 0.0
    %117 = vmatprep.subr.mxu0 0.0
    %118 = vmatpush1.msra.mxu0 0.0
    %119 = vmatprep.subr.mxu0 0.0
    %120 = vmatpush1.msra.mxu0 0.0
    %121 = vmatprep.subr.mxu0 0.0
    %122 = vmatpush1.msra.mxu0 0.0
    %123 = vmatprep.subr.mxu0 0.0
    %124 = vmatpush1.msra.mxu0 0.0
    %125 = vmatprep.subr.mxu0 0.0
    %126 = vmatpush1.msra.mxu0 0.0
    %127 = vmatprep.subr.mxu0 0.0
    %128 = vmatpush1.msra.mxu0 0.0
    %129 = vmatprep.subr.mxu0 0.0
    %130 = vmatpush1.msra.mxu0 0.0
    %131 = vmatprep.subr.mxu0 0.0
    %132 = vmatpush1.msra.mxu0 0.0
    %133 = vmatprep.subr.mxu0 0.0
    %134 = vmatpush1.msra.mxu0 0.0
    %135 = vmatprep.subr.mxu0 0.0
    %136 = vmatpush1.msra.mxu0 0.0
    %137 = vmatprep.subr.mxu0 0.0
    %138 = vmatpush1.msra.mxu0 0.0
    %139 = vmatprep.subr.mxu0 0.0
    %140 = vmatpush1.msra.mxu0 0.0
    %141 = vmatprep.subr.mxu0 0.0
    %142 = vmatpush1.msra.mxu0 0.0
    %143 = vmatprep.subr.mxu0 0.0
    %144 = vmatpush1.msra.mxu0 0.0
    %145 = vmatprep.subr.mxu0 0.0
    %146 = vmatpush1.msra.mxu0 0.0
    %147 = vmatprep.subr.mxu0 0.0
    %148 = vmatpush1.msra.mxu0 0.0
    %149 = vmatprep.subr.mxu0 0.0
    %150 = vmatpush1.msra.mxu0 0.0
    %151 = vmatprep.subr.mxu0 0.0
    %152 = vmatpush1.msra.mxu0 0.0
    %153 = vmatprep.subr.mxu0 0.0
    %154 = vmatpush1.msra.mxu0 0.0
    %155 = vmatprep.mubr.f32.mxu0 0.0
    %156 = vmatmul.mubr.f32.gmra.mrb[0].mxu0 %v89
    %v157 = vpop.f32.mrb[0].mxu0
    %v158 = vadd.f32 %v85, %v157
    %v159 = vpop.f32.mrb[0].mxu0
    %160 = vdwg.mxu0
    %v161 = vld [vmem:[#allocation7] sm:$0xff]
    %v162 = vld [vmem:[#allocation7 + $0x8] sm:$0xff]
    %v163 = vld [vmem:[#allocation7 + $0x10] sm:$0xff]
    %v164 = vld [vmem:[#allocation7 + $0x18] sm:$0xff]
    %vm165 = vcmask 261120
    %v167 = vsel %vm165, 0.0, 0
    %169 = vmatprep.subr.mxu0 0.0
    %170 = vmatpush1.msra.mxu0 %v161
    %171 = vmatprep.subr.mxu0 0.0
    %172 = vmatpush1.msra.mxu0 %v162
    %173 = vmatprep.subr.mxu0 0.0
    %174 = vmatpush1.msra.mxu0 %v163
    %175 = vmatprep.subr.mxu0 0.0
    %176 = vmatpush1.msra.mxu0 %v164
    %177 = vmatprep.subr.mxu0 0.0
    %178 = vmatpush1.msra.mxu0 0.0
    %179 = vmatprep.subr.mxu0 0.0
    %180 = vmatpush1.msra.mxu0 0.0
    %181 = vmatprep.subr.mxu0 0.0
    %182 = vmatpush1.msra.mxu0 0.0
    %183 = vmatprep.subr.mxu0 0.0
    %184 = vmatpush1.msra.mxu0 0.0
    %185 = vmatprep.subr.mxu0 0.0
    %186 = vmatpush1.msra.mxu0 0.0
    %187 = vmatprep.subr.mxu0 0.0
    %188 = vmatpush1.msra.mxu0 0.0
    %189 = vmatprep.subr.mxu0 0.0
    %190 = vmatpush1.msra.mxu0 0.0
    %191 = vmatprep.subr.mxu0 0.0
    %192 = vmatpush1.msra.mxu0 0.0
    %193 = vmatprep.subr.mxu0 0.0
    %194 = vmatpush1.msra.mxu0 0.0
    %195 = vmatprep.subr.mxu0 0.0
    %196 = vmatpush1.msra.mxu0 0.0
    %197 = vmatprep.subr.mxu0 0.0
    %198 = vmatpush1.msra.mxu0 0.0
    %199 = vmatprep.subr.mxu0 0.0
    %200 = vmatpush1.msra.mxu0 0.0
    %201 = vmatprep.subr.mxu0 0.0
    %202 = vmatpush1.msra.mxu0 0.0
    %203 = vmatprep.subr.mxu0 0.0
    %204 = vmatpush1.msra.mxu0 0.0
    %205 = vmatprep.subr.mxu0 0.0
    %206 = vmatpush1.msra.mxu0 0.0
    %207 = vmatprep.subr.mxu0 0.0
    %208 = vmatpush1.msra.mxu0 0.0
    %209 = vmatprep.subr.mxu0 0.0
    %210 = vmatpush1.msra.mxu0 0.0
    %211 = vmatprep.subr.mxu0 0.0
    %212 = vmatpush1.msra.mxu0 0.0
    %213 = vmatprep.subr.mxu0 0.0
    %214 = vmatpush1.msra.mxu0 0.0
    %215 = vmatprep.subr.mxu0 0.0
    %216 = vmatpush1.msra.mxu0 0.0
    %217 = vmatprep.subr.mxu0 0.0
    %218 = vmatpush1.msra.mxu0 0.0
    %219 = vmatprep.subr.mxu0 0.0
    %220 = vmatpush1.msra.mxu0 0.0
    %221 = vmatprep.subr.mxu0 0.0
    %222 = vmatpush1.msra.mxu0 0.0
    %223 = vmatprep.subr.mxu0 0.0
    %224 = vmatpush1.msra.mxu0 0.0
    %225 = vmatprep.subr.mxu0 0.0
    %226 = vmatpush1.msra.mxu0 0.0
    %227 = vmatprep.subr.mxu0 0.0
    %228 = vmatpush1.msra.mxu0 0.0
    %229 = vmatprep.subr.mxu0 0.0
    %230 = vmatpush1.msra.mxu0 0.0
    %231 = vmatprep.subr.mxu0 0.0
    %232 = vmatpush1.msra.mxu0 0.0
    %233 = vmatprep.mubr.f32.mxu0 0.0
    %234 = vmatmul.mubr.f32.gmra.mrb[0].mxu0 %v167
    %v235 = vpop.f32.mrb[0].mxu0
    %v236 = vadd.f32 0.0, %v235
    %v237 = vpop.f32.mrb[0].mxu0
    %238 = vdwg.mxu0
    %v239 = vadd.f32 %v158, %v236
    %v240 = vxor.u32 %v239, 2147483648
    %v241 = vmul.f32 %v240, 1.442695
    %v242 = vpow.pop %v241
    %v243 = vadd.f32 %v242, 1.0
    %v244 = vrcp.pop %v243
    %v245 = vmul.f32 1.0, %v244
    %v246 = vtanh.pop %v239
    %v247 = vmul.f32 %v245, 0.0
    %249 = vrot.lane.b32.xlu0 %v246, 32
    %v250 = vpop.permute.xlu0 %249
    %v252 = vmul.f32 %v245, %v250
    %254 = vrot.lane.b32.xlu0 %v252, 32
    %v255 = vpop.permute.xlu0 %254
    %v257 = vadd.f32 %v247, %v255
    %v258 = vtanh.pop %v257
    %260 = vrot.lane.b32.xlu0 %v258, 32
    %v261 = vpop.permute.xlu0 %260
    %v263 = vmul.f32 %v245, %v261
    %265 = vrot.lane.b32.xlu0 %v263, 64
    %v266 = vpop.permute.xlu0 %265
    %v267 = vsel %vm165, %v266, 0
    %269 = vmatprep.subr.mxu0 0.0
    %270 = vmatpush1.msra.mxu0 %v161
    %271 = vmatprep.subr.mxu0 0.0
    %272 = vmatpush1.msra.mxu0 %v162
    %273 = vmatprep.subr.mxu0 0.0
    %274 = vmatpush1.msra.mxu0 %v163
    %275 = vmatprep.subr.mxu0 0.0
    %276 = vmatpush1.msra.mxu0 %v164
    %277 = vmatprep.subr.mxu0 0.0
    %278 = vmatpush1.msra.mxu0 0.0
    %279 = vmatprep.subr.mxu0 0.0
    %280 = vmatpush1.msra.mxu0 0.0
    %281 = vmatprep.subr.mxu0 0.0
    %282 = vmatpush1.msra.mxu0 0.0
    %283 = vmatprep.subr.mxu0 0.0
    %284 = vmatpush1.msra.mxu0 0.0
    %285 = vmatprep.subr.mxu0 0.0
    %286 = vmatpush1.msra.mxu0 0.0
    %287 = vmatprep.subr.mxu0 0.0
    %288 = vmatpush1.msra.mxu0 0.0
    %289 = vmatprep.subr.mxu0 0.0
    %290 = vmatpush1.msra.mxu0 0.0
    %291 = vmatprep.subr.mxu0 0.0
    %292 = vmatpush1.msra.mxu0 0.0
    %293 = vmatprep.subr.mxu0 0.0
    %294 = vmatpush1.msra.mxu0 0.0
    %295 = vmatprep.subr.mxu0 0.0
    %296 = vmatpush1.msra.mxu0 0.0
    %297 = vmatprep.subr.mxu0 0.0
    %298 = vmatpush1.msra.mxu0 0.0
    %299 = vmatprep.subr.mxu0 0.0
    %300 = vmatpush1.msra.mxu0 0.0
    %301 = vmatprep.subr.mxu0 0.0
    %302 = vmatpush1.msra.mxu0 0.0
    %303 = vmatprep.subr.mxu0 0.0
    %304 = vmatpush1.msra.mxu0 0.0
    %305 = vmatprep.subr.mxu0 0.0
    %306 = vmatpush1.msra.mxu0 0.0
    %307 = vmatprep.subr.mxu0 0.0
    %308 = vmatpush1.msra.mxu0 0.0
    %309 = vmatprep.subr.mxu0 0.0
    %310 = vmatpush1.msra.mxu0 0.0
    %311 = vmatprep.subr.mxu0 0.0
    %312 = vmatpush1.msra.mxu0 0.0
    %313 = vmatprep.subr.mxu0 0.0
    %314 = vmatpush1.msra.mxu0 0.0
    %315 = vmatprep.subr.mxu0 0.0
    %316 = vmatpush1.msra.mxu0 0.0
    %317 = vmatprep.subr.mxu0 0.0
    %318 = vmatpush1.msra.mxu0 0.0
    %319 = vmatprep.subr.mxu0 0.0
    %320 = vmatpush1.msra.mxu0 0.0
    %321 = vmatprep.subr.mxu0 0.0
    %322 = vmatpush1.msra.mxu0 0.0
    %323 = vmatprep.subr.mxu0 0.0
    %324 = vmatpush1.msra.mxu0 0.0
    %325 = vmatprep.subr.mxu0 0.0
    %326 = vmatpush1.msra.mxu0 0.0
    %327 = vmatprep.subr.mxu0 0.0
    %328 = vmatpush1.msra.mxu0 0.0
    %329 = vmatprep.subr.mxu0 0.0
    %330 = vmatpush1.msra.mxu0 0.0
    %331 = vmatprep.subr.mxu0 0.0
    %332 = vmatpush1.msra.mxu0 0.0
    %333 = vmatprep.mubr.f32.mxu0 0.0
    %334 = vmatmul.mubr.f32.gmra.mrb[0].mxu0 %v267
    %v335 = vpop.f32.mrb[0].mxu0
    %v336 = vadd.f32 0.0, %v335
    %v337 = vpop.f32.mrb[0].mxu0
    %338 = vdwg.mxu0
    %v339 = vadd.f32 %v158, %v336
    %v340 = vxor.u32 %v339, 2147483648
    %v341 = vmul.f32 %v340, 1.442695
    %v342 = vpow.pop %v341
    %v343 = vadd.f32 %v342, 1.0
    %v344 = vrcp.pop %v343
    %v345 = vmul.f32 1.0, %v344
    %v346 = vtanh.pop %v339
    %v347 = vmul.f32 %v345, %v257
    %349 = vrot.lane.b32.xlu0 %v346, 32
    %v350 = vpop.permute.xlu0 %349
    %v352 = vmul.f32 %v345, %v350
    %354 = vrot.lane.b32.xlu0 %v352, 32
    %v355 = vpop.permute.xlu0 %354
    %v357 = vadd.f32 %v347, %v355
    %v358 = vtanh.pop %v357
    %360 = vrot.lane.b32.xlu0 %v358, 32
    %v361 = vpop.permute.xlu0 %360
    %v363 = vmul.f32 %v345, %v361
    %365 = vrot.lane.b32.xlu0 %v363, 64
    %v366 = vpop.permute.xlu0 %365
    %v367 = vsel %vm165, %v366, 0
    %369 = vmatprep.subr.mxu0 0.0
    %370 = vmatpush1.msra.mxu0 %v161
    %371 = vmatprep.subr.mxu0 0.0
    %372 = vmatpush1.msra.mxu0 %v162
    %373 = vmatprep.subr.mxu0 0.0
    %374 = vmatpush1.msra.mxu0 %v163
    %375 = vmatprep.subr.mxu0 0.0
    %376 = vmatpush1.msra.mxu0 %v164
    %377 = vmatprep.subr.mxu0 0.0
    %378 = vmatpush1.msra.mxu0 0.0
    %379 = vmatprep.subr.mxu0 0.0
    %380 = vmatpush1.msra.mxu0 0.0
    %381 = vmatprep.subr.mxu0 0.0
    %382 = vmatpush1.msra.mxu0 0.0
    %383 = vmatprep.subr.mxu0 0.0
    %384 = vmatpush1.msra.mxu0 0.0
    %385 = vmatprep.subr.mxu0 0.0
    %386 = vmatpush1.msra.mxu0 0.0
    %387 = vmatprep.subr.mxu0 0.0
    %388 = vmatpush1.msra.mxu0 0.0
    %389 = vmatprep.subr.mxu0 0.0
    %390 = vmatpush1.msra.mxu0 0.0
    %391 = vmatprep.subr.mxu0 0.0
    %392 = vmatpush1.msra.mxu0 0.0
    %393 = vmatprep.subr.mxu0 0.0
    %394 = vmatpush1.msra.mxu0 0.0
    %395 = vmatprep.subr.mxu0 0.0
    %396 = vmatpush1.msra.mxu0 0.0
    %397 = vmatprep.subr.mxu0 0.0
    %398 = vmatpush1.msra.mxu0 0.0
    %399 = vmatprep.subr.mxu0 0.0
    %400 = vmatpush1.msra.mxu0 0.0
    %401 = vmatprep.subr.mxu0 0.0
    %402 = vmatpush1.msra.mxu0 0.0
    %403 = vmatprep.subr.mxu0 0.0
    %404 = vmatpush1.msra.mxu0 0.0
    %405 = vmatprep.subr.mxu0 0.0
    %406 = vmatpush1.msra.mxu0 0.0
    %407 = vmatprep.subr.mxu0 0.0
    %408 = vmatpush1.msra.mxu0 0.0
    %409 = vmatprep.subr.mxu0 0.0
    %410 = vmatpush1.msra.mxu0 0.0
    %411 = vmatprep.subr.mxu0 0.0
    %412 = vmatpush1.msra.mxu0 0.0
    %413 = vmatprep.subr.mxu0 0.0
    %414 = vmatpush1.msra.mxu0 0.0
    %415 = vmatprep.subr.mxu0 0.0
    %416 = vmatpush1.msra.mxu0 0.0
    %417 = vmatprep.subr.mxu0 0.0
    %418 = vmatpush1.msra.mxu0 0.0
    %419 = vmatprep.subr.mxu0 0.0
    %420 = vmatpush1.msra.mxu0 0.0
    %421 = vmatprep.subr.mxu0 0.0
    %422 = vmatpush1.msra.mxu0 0.0
    %423 = vmatprep.subr.mxu0 0.0
    %424 = vmatpush1.msra.mxu0 0.0
    %425 = vmatprep.subr.mxu0 0.0
    %426 = vmatpush1.msra.mxu0 0.0
    %427 = vmatprep.subr.mxu0 0.0
    %428 = vmatpush1.msra.mxu0 0.0
    %429 = vmatprep.subr.mxu0 0.0
    %430 = vmatpush1.msra.mxu0 0.0
    %431 = vmatprep.subr.mxu0 0.0
    %432 = vmatpush1.msra.mxu0 0.0
    %433 = vmatprep.mubr.f32.mxu0 0.0
    %434 = vmatmul.mubr.f32.gmra.mrb[0].mxu0 %v367
    %v435 = vpop.f32.mrb[0].mxu0
    %v436 = vadd.f32 0.0, %v435
    %v437 = vpop.f32.mrb[0].mxu0
    %438 = vdwg.mxu0
    %v439 = vadd.f32 %v158, %v436
    %v440 = vxor.u32 %v439, 2147483648
    %v441 = vmul.f32 %v440, 1.442695
    %v442 = vpow.pop %v441
    %v443 = vadd.f32 %v442, 1.0
    %v444 = vrcp.pop %v443
    %v445 = vmul.f32 1.0, %v444
    %v446 = vtanh.pop %v439
    %v447 = vmul.f32 %v445, %v357
    %449 = vrot.lane.b32.xlu0 %v446, 32
    %v450 = vpop.permute.xlu0 %449
    %v452 = vmul.f32 %v445, %v450
    %454 = vrot.lane.b32.xlu0 %v452, 32
    %v455 = vpop.permute.xlu0 %454
    %v457 = vadd.f32 %v447, %v455
    %v458 = vtanh.pop %v457
    %460 = vrot.lane.b32.xlu0 %v458, 32
    %v461 = vpop.permute.xlu0 %460
    %v463 = vmul.f32 %v445, %v461
    %465 = vrot.lane.b32.xlu0 %v463, 64
    %v466 = vpop.permute.xlu0 %465
    %v467 = vsel %vm165, %v466, 0
    %469 = vmatprep.subr.mxu0 0.0
    %470 = vmatpush1.msra.mxu0 %v161
    %471 = vmatprep.subr.mxu0 0.0
    %472 = vmatpush1.msra.mxu0 %v162
    %473 = vmatprep.subr.mxu0 0.0
    %474 = vmatpush1.msra.mxu0 %v163
    %475 = vmatprep.subr.mxu0 0.0
    %476 = vmatpush1.msra.mxu0 %v164
    %477 = vmatprep.subr.mxu0 0.0
    %478 = vmatpush1.msra.mxu0 0.0
    %479 = vmatprep.subr.mxu0 0.0
    %480 = vmatpush1.msra.mxu0 0.0
    %481 = vmatprep.subr.mxu0 0.0
    %482 = vmatpush1.msra.mxu0 0.0
    %483 = vmatprep.subr.mxu0 0.0
    %484 = vmatpush1.msra.mxu0 0.0
    %485 = vmatprep.subr.mxu0 0.0
    %486 = vmatpush1.msra.mxu0 0.0
    %487 = vmatprep.subr.mxu0 0.0
    %488 = vmatpush1.msra.mxu0 0.0
    %489 = vmatprep.subr.mxu0 0.0
    %490 = vmatpush1.msra.mxu0 0.0
    %491 = vmatprep.subr.mxu0 0.0
    %492 = vmatpush1.msra.mxu0 0.0
    %493 = vmatprep.subr.mxu0 0.0
    %494 = vmatpush1.msra.mxu0 0.0
    %495 = vmatprep.subr.mxu0 0.0
    %496 = vmatpush1.msra.mxu0 0.0
    %497 = vmatprep.subr.mxu0 0.0
    %498 = vmatpush1.msra.mxu0 0.0
    %499 = vmatprep.subr.mxu0 0.0
    %500 = vmatpush1.msra.mxu0 0.0
    %501 = vmatprep.subr.mxu0 0.0
    %502 = vmatpush1.msra.mxu0 0.0
    %503 = vmatprep.subr.mxu0 0.0
    %504 = vmatpush1.msra.mxu0 0.0
    %505 = vmatprep.subr.mxu0 0.0
    %506 = vmatpush1.msra.mxu0 0.0
    %507 = vmatprep.subr.mxu0 0.0
    %508 = vmatpush1.msra.mxu0 0.0
    %509 = vmatprep.subr.mxu0 0.0
    %510 = vmatpush1.msra.mxu0 0.0
    %511 = vmatprep.subr.mxu0 0.0
    %512 = vmatpush1.msra.mxu0 0.0
    %513 = vmatprep.subr.mxu0 0.0
    %514 = vmatpush1.msra.mxu0 0.0
    %515 = vmatprep.subr.mxu0 0.0
    %516 = vmatpush1.msra.mxu0 0.0
    %517 = vmatprep.subr.mxu0 0.0
    %518 = vmatpush1.msra.mxu0 0.0
    %519 = vmatprep.subr.mxu0 0.0
    %520 = vmatpush1.msra.mxu0 0.0
    %521 = vmatprep.subr.mxu0 0.0
    %522 = vmatpush1.msra.mxu0 0.0
    %523 = vmatprep.subr.mxu0 0.0
    %524 = vmatpush1.msra.mxu0 0.0
    %525 = vmatprep.subr.mxu0 0.0
    %526 = vmatpush1.msra.mxu0 0.0
    %527 = vmatprep.subr.mxu0 0.0
    %528 = vmatpush1.msra.mxu0 0.0
    %529 = vmatprep.subr.mxu0 0.0
    %530 = vmatpush1.msra.mxu0 0.0
    %531 = vmatprep.subr.mxu0 0.0
    %532 = vmatpush1.msra.mxu0 0.0
    %533 = vmatprep.mubr.f32.mxu0 0.0
    %534 = vmatmul.mubr.f32.gmra.mrb[0].mxu0 %v467
    %v535 = vpop.f32.mrb[0].mxu0
    %v536 = vadd.f32 0.0, %v535
    %v537 = vpop.f32.mrb[0].mxu0
    %538 = vdwg.mxu0
    %v539 = vadd.f32 %v158, %v536
    %v540 = vxor.u32 %v539, 2147483648
    %v541 = vmul.f32 %v540, 1.442695
    %v542 = vpow.pop %v541
    %v543 = vadd.f32 %v542, 1.0
    %v544 = vrcp.pop %v543
    %v545 = vmul.f32 1.0, %v544
    %v546 = vtanh.pop %v539
    %v547 = vmul.f32 %v545, %v457
    %549 = vrot.lane.b32.xlu0 %v546, 32
    %v550 = vpop.permute.xlu0 %549
    %v552 = vmul.f32 %v545, %v550
    %554 = vrot.lane.b32.xlu0 %v552, 32
    %v555 = vpop.permute.xlu0 %554
    %v557 = vadd.f32 %v547, %v555
    %v558 = vtanh.pop %v557
    %560 = vrot.lane.b32.xlu0 %v558, 32
    %v561 = vpop.permute.xlu0 %560
    %v563 = vmul.f32 %v545, %v561
    %565 = vrot.lane.b32.xlu0 %v563, 64
    %v566 = vpop.permute.xlu0 %565
    %v567 = vsel %vm165, %v566, 0
    %569 = vmatprep.subr.mxu0 0.0
    %570 = vmatpush1.msra.mxu0 %v161
    %571 = vmatprep.subr.mxu0 0.0
    %572 = vmatpush1.msra.mxu0 %v162
    %573 = vmatprep.subr.mxu0 0.0
    %574 = vmatpush1.msra.mxu0 %v163
    %575 = vmatprep.subr.mxu0 0.0
    %576 = vmatpush1.msra.mxu0 %v164
    %577 = vmatprep.subr.mxu0 0.0
    %578 = vmatpush1.msra.mxu0 0.0
    %579 = vmatprep.subr.mxu0 0.0
    %580 = vmatpush1.msra.mxu0 0.0
    %581 = vmatprep.subr.mxu0 0.0
    %582 = vmatpush1.msra.mxu0 0.0
    %583 = vmatprep.subr.mxu0 0.0
    %584 = vmatpush1.msra.mxu0 0.0
    %585 = vmatprep.subr.mxu0 0.0
    %586 = vmatpush1.msra.mxu0 0.0
    %587 = vmatprep.subr.mxu0 0.0
    %588 = vmatpush1.msra.mxu0 0.0
    %589 = vmatprep.subr.mxu0 0.0
    %590 = vmatpush1.msra.mxu0 0.0
    %591 = vmatprep.subr.mxu0 0.0
    %592 = vmatpush1.msra.mxu0 0.0
    %593 = vmatprep.subr.mxu0 0.0
    %594 = vmatpush1.msra.mxu0 0.0
    %595 = vmatprep.subr.mxu0 0.0
    %596 = vmatpush1.msra.mxu0 0.0
    %597 = vmatprep.subr.mxu0 0.0
    %598 = vmatpush1.msra.mxu0 0.0
    %599 = vmatprep.subr.mxu0 0.0
    %600 = vmatpush1.msra.mxu0 0.0
    %601 = vmatprep.subr.mxu0 0.0
    %602 = vmatpush1.msra.mxu0 0.0
    %603 = vmatprep.subr.mxu0 0.0
    %604 = vmatpush1.msra.mxu0 0.0
    %605 = vmatprep.subr.mxu0 0.0
    %606 = vmatpush1.msra.mxu0 0.0
    %607 = vmatprep.subr.mxu0 0.0
    %608 = vmatpush1.msra.mxu0 0.0
    %609 = vmatprep.subr.mxu0 0.0
    %610 = vmatpush1.msra.mxu0 0.0
    %611 = vmatprep.subr.mxu0 0.0
    %612 = vmatpush1.msra.mxu0 0.0
    %613 = vmatprep.subr.mxu0 0.0
    %614 = vmatpush1.msra.mxu0 0.0
    %615 = vmatprep.subr.mxu0 0.0
    %616 = vmatpush1.msra.mxu0 0.0
    %617 = vmatprep.subr.mxu0 0.0
    %618 = vmatpush1.msra.mxu0 0.0
    %619 = vmatprep.subr.mxu0 0.0
    %620 = vmatpush1.msra.mxu0 0.0
    %621 = vmatprep.subr.mxu0 0.0
    %622 = vmatpush1.msra.mxu0 0.0
    %623 = vmatprep.subr.mxu0 0.0
    %624 = vmatpush1.msra.mxu0 0.0
    %625 = vmatprep.subr.mxu0 0.0
    %626 = vmatpush1.msra.mxu0 0.0
    %627 = vmatprep.subr.mxu0 0.0
    %628 = vmatpush1.msra.mxu0 0.0
    %629 = vmatprep.subr.mxu0 0.0
    %630 = vmatpush1.msra.mxu0 0.0
    %631 = vmatprep.subr.mxu0 0.0
    %632 = vmatpush1.msra.mxu0 0.0
    %633 = vmatprep.mubr.f32.mxu0 0.0
    %634 = vmatmul.mubr.f32.gmra.mrb[0].mxu0 %v567
    %v635 = vpop.f32.mrb[0].mxu0
    %v636 = vadd.f32 0.0, %v635
    %v637 = vpop.f32.mrb[0].mxu0
    %638 = vdwg.mxu0
    %v639 = vadd.f32 %v158, %v636
    %v640 = vxor.u32 %v639, 2147483648
    %v641 = vmul.f32 %v640, 1.442695
    %v642 = vpow.pop %v641
    %v643 = vadd.f32 %v642, 1.0
    %v644 = vrcp.pop %v643
    %v645 = vmul.f32 1.0, %v644
    %v646 = vtanh.pop %v639
    %v647 = vmul.f32 %v645, %v557
    %649 = vrot.lane.b32.xlu0 %v646, 32
    %v650 = vpop.permute.xlu0 %649
    %v652 = vmul.f32 %v645, %v650
    %654 = vrot.lane.b32.xlu0 %v652, 32
    %v655 = vpop.permute.xlu0 %654
    %v657 = vadd.f32 %v647, %v655
    %v658 = vtanh.pop %v657
    %660 = vrot.lane.b32.xlu0 %v658, 32
    %v661 = vpop.permute.xlu0 %660
    %v663 = vmul.f32 %v645, %v661
    %665 = vrot.lane.b32.xlu0 %v663, 64
    %v666 = vpop.permute.xlu0 %665
    %v667 = vsel %vm165, %v666, 0
    %669 = vmatprep.subr.mxu0 0.0
    %670 = vmatpush1.msra.mxu0 %v161
    %671 = vmatprep.subr.mxu0 0.0
    %672 = vmatpush1.msra.mxu0 %v162
    %673 = vmatprep.subr.mxu0 0.0
    %674 = vmatpush1.msra.mxu0 %v163
    %675 = vmatprep.subr.mxu0 0.0
    %676 = vmatpush1.msra.mxu0 %v164
    %677 = vmatprep.subr.mxu0 0.0
    %678 = vmatpush1.msra.mxu0 0.0
    %679 = vmatprep.subr.mxu0 0.0
    %680 = vmatpush1.msra.mxu0 0.0
    %681 = vmatprep.subr.mxu0 0.0
    %682 = vmatpush1.msra.mxu0 0.0
    %683 = vmatprep.subr.mxu0 0.0
    %684 = vmatpush1.msra.mxu0 0.0
    %685 = vmatprep.subr.mxu0 0.0
    %686 = vmatpush1.msra.mxu0 0.0
    %687 = vmatprep.subr.mxu0 0.0
    %688 = vmatpush1.msra.mxu0 0.0
    %689 = vmatprep.subr.mxu0 0.0
    %690 = vmatpush1.msra.mxu0 0.0
    %691 = vmatprep.subr.mxu0 0.0
    %692 = vmatpush1.msra.mxu0 0.0
    %693 = vmatprep.subr.mxu0 0.0
    %694 = vmatpush1.msra.mxu0 0.0
    %695 = vmatprep.subr.mxu0 0.0
    %696 = vmatpush1.msra.mxu0 0.0
    %697 = vmatprep.subr.mxu0 0.0
    %698 = vmatpush1.msra.mxu0 0.0
    %699 = vmatprep.subr.mxu0 0.0
    %700 = vmatpush1.msra.mxu0 0.0
    %701 = vmatprep.subr.mxu0 0.0
    %702 = vmatpush1.msra.mxu0 0.0
    %703 = vmatprep.subr.mxu0 0.0
    %704 = vmatpush1.msra.mxu0 0.0
    %705 = vmatprep.subr.mxu0 0.0
    %706 = vmatpush1.msra.mxu0 0.0
    %707 = vmatprep.subr.mxu0 0.0
    %708 = vmatpush1.msra.mxu0 0.0
    %709 = vmatprep.subr.mxu0 0.0
    %710 = vmatpush1.msra.mxu0 0.0
    %711 = vmatprep.subr.mxu0 0.0
    %712 = vmatpush1.msra.mxu0 0.0
    %713 = vmatprep.subr.mxu0 0.0
    %714 = vmatpush1.msra.mxu0 0.0
    %715 = vmatprep.subr.mxu0 0.0
    %716 = vmatpush1.msra.mxu0 0.0
    %717 = vmatprep.subr.mxu0 0.0
    %718 = vmatpush1.msra.mxu0 0.0
    %719 = vmatprep.subr.mxu0 0.0
    %720 = vmatpush1.msra.mxu0 0.0
    %721 = vmatprep.subr.mxu0 0.0
    %722 = vmatpush1.msra.mxu0 0.0
    %723 = vmatprep.subr.mxu0 0.0
    %724 = vmatpush1.msra.mxu0 0.0
    %725 = vmatprep.subr.mxu0 0.0
    %726 = vmatpush1.msra.mxu0 0.0
    %727 = vmatprep.subr.mxu0 0.0
    %728 = vmatpush1.msra.mxu0 0.0
    %729 = vmatprep.subr.mxu0 0.0
    %730 = vmatpush1.msra.mxu0 0.0
    %731 = vmatprep.subr.mxu0 0.0
    %732 = vmatpush1.msra.mxu0 0.0
    %733 = vmatprep.mubr.f32.mxu0 0.0
    %734 = vmatmul.mubr.f32.gmra.mrb[0].mxu0 %v667
    %v735 = vpop.f32.mrb[0].mxu0
    %v736 = vadd.f32 0.0, %v735
    %v737 = vpop.f32.mrb[0].mxu0
    %738 = vdwg.mxu0
    %v739 = vadd.f32 %v158, %v736
    %v740 = vxor.u32 %v739, 2147483648
    %v741 = vmul.f32 %v740, 1.442695
    %v742 = vpow.pop %v741
    %v743 = vadd.f32 %v742, 1.0
    %v744 = vrcp.pop %v743
    %v745 = vmul.f32 1.0, %v744
    %v746 = vtanh.pop %v739
    %v747 = vmul.f32 %v745, %v657
    %749 = vrot.lane.b32.xlu0 %v746, 32
    %v750 = vpop.permute.xlu0 %749
    %v752 = vmul.f32 %v745, %v750
    %754 = vrot.lane.b32.xlu0 %v752, 32
    %v755 = vpop.permute.xlu0 %754
    %v757 = vadd.f32 %v747, %v755
    %v758 = vtanh.pop %v757
    %760 = vrot.lane.b32.xlu0 %v758, 32
    %v761 = vpop.permute.xlu0 %760
    %v763 = vmul.f32 %v745, %v761
    %765 = vrot.lane.b32.xlu0 %v763, 64
    %v766 = vpop.permute.xlu0 %765
    %v767 = vsel %vm165, %v766, 0
    %769 = vmatprep.subr.mxu0 0.0
    %770 = vmatpush1.msra.mxu0 %v161
    %771 = vmatprep.subr.mxu0 0.0
    %772 = vmatpush1.msra.mxu0 %v162
    %773 = vmatprep.subr.mxu0 0.0
    %774 = vmatpush1.msra.mxu0 %v163
    %775 = vmatprep.subr.mxu0 0.0
    %776 = vmatpush1.msra.mxu0 %v164
    %777 = vmatprep.subr.mxu0 0.0
    %778 = vmatpush1.msra.mxu0 0.0
    %779 = vmatprep.subr.mxu0 0.0
    %780 = vmatpush1.msra.mxu0 0.0
    %781 = vmatprep.subr.mxu0 0.0
    %782 = vmatpush1.msra.mxu0 0.0
    %783 = vmatprep.subr.mxu0 0.0
    %784 = vmatpush1.msra.mxu0 0.0
    %785 = vmatprep.subr.mxu0 0.0
    %786 = vmatpush1.msra.mxu0 0.0
    %787 = vmatprep.subr.mxu0 0.0
    %788 = vmatpush1.msra.mxu0 0.0
    %789 = vmatprep.subr.mxu0 0.0
    %790 = vmatpush1.msra.mxu0 0.0
    %791 = vmatprep.subr.mxu0 0.0
    %792 = vmatpush1.msra.mxu0 0.0
    %793 = vmatprep.subr.mxu0 0.0
    %794 = vmatpush1.msra.mxu0 0.0
    %795 = vmatprep.subr.mxu0 0.0
    %796 = vmatpush1.msra.mxu0 0.0
    %797 = vmatprep.subr.mxu0 0.0
    %798 = vmatpush1.msra.mxu0 0.0
    %799 = vmatprep.subr.mxu0 0.0
    %800 = vmatpush1.msra.mxu0 0.0
    %801 = vmatprep.subr.mxu0 0.0
    %802 = vmatpush1.msra.mxu0 0.0
    %803 = vmatprep.subr.mxu0 0.0
    %804 = vmatpush1.msra.mxu0 0.0
    %805 = vmatprep.subr.mxu0 0.0
    %806 = vmatpush1.msra.mxu0 0.0
    %807 = vmatprep.subr.mxu0 0.0
    %808 = vmatpush1.msra.mxu0 0.0
    %809 = vmatprep.subr.mxu0 0.0
    %810 = vmatpush1.msra.mxu0 0.0
    %811 = vmatprep.subr.mxu0 0.0
    %812 = vmatpush1.msra.mxu0 0.0
    %813 = vmatprep.subr.mxu0 0.0
    %814 = vmatpush1.msra.mxu0 0.0
    %815 = vmatprep.subr.mxu0 0.0
    %816 = vmatpush1.msra.mxu0 0.0
    %817 = vmatprep.subr.mxu0 0.0
    %818 = vmatpush1.msra.mxu0 0.0
    %819 = vmatprep.subr.mxu0 0.0
    %820 = vmatpush1.msra.mxu0 0.0
    %821 = vmatprep.subr.mxu0 0.0
    %822 = vmatpush1.msra.mxu0 0.0
    %823 = vmatprep.subr.mxu0 0.0
    %824 = vmatpush1.msra.mxu0 0.0
    %825 = vmatprep.subr.mxu0 0.0
    %826 = vmatpush1.msra.mxu0 0.0
    %827 = vmatprep.subr.mxu0 0.0
    %828 = vmatpush1.msra.mxu0 0.0
    %829 = vmatprep.subr.mxu0 0.0
    %830 = vmatpush1.msra.mxu0 0.0
    %831 = vmatprep.subr.mxu0 0.0
    %832 = vmatpush1.msra.mxu0 0.0
    %833 = vmatprep.mubr.f32.mxu0 0.0
    %834 = vmatmul.mubr.f32.gmra.mrb[0].mxu0 %v767
    %v835 = vpop.f32.mrb[0].mxu0
    %v836 = vadd.f32 0.0, %v835
    %v837 = vpop.f32.mrb[0].mxu0
    %838 = vdwg.mxu0
    %v839 = vadd.f32 %v158, %v836
    %v840 = vxor.u32 %v839, 2147483648
    %v841 = vmul.f32 %v840, 1.442695
    %v842 = vpow.pop %v841
    %v843 = vadd.f32 %v842, 1.0
    %v844 = vrcp.pop %v843
    %v845 = vmul.f32 1.0, %v844
    %v846 = vtanh.pop %v839
    %v847 = vmul.f32 %v845, %v757
    %849 = vrot.lane.b32.xlu0 %v846, 32
    %v850 = vpop.permute.xlu0 %849
    %v852 = vmul.f32 %v845, %v850
    %854 = vrot.lane.b32.xlu0 %v852, 32
    %v855 = vpop.permute.xlu0 %854
    %v857 = vadd.f32 %v847, %v855
    %v858 = vtanh.pop %v857
    %860 = vrot.lane.b32.xlu0 %v858, 32
    %v861 = vpop.permute.xlu0 %860
    %v863 = vmul.f32 %v845, %v861
    %865 = vrot.lane.b32.xlu0 %v863, 64
    %v866 = vpop.permute.xlu0 %865
    %v867 = vsel %vm165, %v866, 0
    %869 = vmatprep.subr.mxu0 0.0
    %870 = vmatpush1.msra.mxu0 %v161
    %871 = vmatprep.subr.mxu0 0.0
    %872 = vmatpush1.msra.mxu0 %v162
    %873 = vmatprep.subr.mxu0 0.0
    %874 = vmatpush1.msra.mxu0 %v163
    %875 = vmatprep.subr.mxu0 0.0
    %876 = vmatpush1.msra.mxu0 %v164
    %877 = vmatprep.subr.mxu0 0.0
    %878 = vmatpush1.msra.mxu0 0.0
    %879 = vmatprep.subr.mxu0 0.0
    %880 = vmatpush1.msra.mxu0 0.0
    %881 = vmatprep.subr.mxu0 0.0
    %882 = vmatpush1.msra.mxu0 0.0
    %883 = vmatprep.subr.mxu0 0.0
    %884 = vmatpush1.msra.mxu0 0.0
    %885 = vmatprep.subr.mxu0 0.0
    %886 = vmatpush1.msra.mxu0 0.0
    %887 = vmatprep.subr.mxu0 0.0
    %888 = vmatpush1.msra.mxu0 0.0
    %889 = vmatprep.subr.mxu0 0.0
    %890 = vmatpush1.msra.mxu0 0.0
    %891 = vmatprep.subr.mxu0 0.0
    %892 = vmatpush1.msra.mxu0 0.0
    %893 = vmatprep.subr.mxu0 0.0
    %894 = vmatpush1.msra.mxu0 0.0
    %895 = vmatprep.subr.mxu0 0.0
    %896 = vmatpush1.msra.mxu0 0.0
    %897 = vmatprep.subr.mxu0 0.0
    %898 = vmatpush1.msra.mxu0 0.0
    %899 = vmatprep.subr.mxu0 0.0
    %900 = vmatpush1.msra.mxu0 0.0
    %901 = vmatprep.subr.mxu0 0.0
    %902 = vmatpush1.msra.mxu0 0.0
    %903 = vmatprep.subr.mxu0 0.0
    %904 = vmatpush1.msra.mxu0 0.0
    %905 = vmatprep.subr.mxu0 0.0
    %906 = vmatpush1.msra.mxu0 0.0
    %907 = vmatprep.subr.mxu0 0.0
    %908 = vmatpush1.msra.mxu0 0.0
    %909 = vmatprep.subr.mxu0 0.0
    %910 = vmatpush1.msra.mxu0 0.0
    %911 = vmatprep.subr.mxu0 0.0
    %912 = vmatpush1.msra.mxu0 0.0
    %913 = vmatprep.subr.mxu0 0.0
    %914 = vmatpush1.msra.mxu0 0.0
    %915 = vmatprep.subr.mxu0 0.0
    %916 = vmatpush1.msra.mxu0 0.0
    %917 = vmatprep.subr.mxu0 0.0
    %918 = vmatpush1.msra.mxu0 0.0
    %919 = vmatprep.subr.mxu0 0.0
    %920 = vmatpush1.msra.mxu0 0.0
    %921 = vmatprep.subr.mxu0 0.0
    %922 = vmatpush1.msra.mxu0 0.0
    %923 = vmatprep.subr.mxu0 0.0
    %924 = vmatpush1.msra.mxu0 0.0
    %925 = vmatprep.subr.mxu0 0.0
    %926 = vmatpush1.msra.mxu0 0.0
    %927 = vmatprep.subr.mxu0 0.0
    %928 = vmatpush1.msra.mxu0 0.0
    %929 = vmatprep.subr.mxu0 0.0
    %930 = vmatpush1.msra.mxu0 0.0
    %931 = vmatprep.subr.mxu0 0.0
    %932 = vmatpush1.msra.mxu0 0.0
    %933 = vmatprep.mubr.f32.mxu0 0.0
    %934 = vmatmul.mubr.f32.gmra.mrb[0].mxu0 %v867
    %v935 = vpop.f32.mrb[0].mxu0
    %v936 = vadd.f32 0.0, %v935
    %v937 = vpop.f32.mrb[0].mxu0
    %938 = vdwg.mxu0
    %v939 = vadd.f32 %v158, %v936
    %v940 = vxor.u32 %v939, 2147483648
    %v941 = vmul.f32 %v940, 1.442695
    %v942 = vpow.pop %v941
    %v943 = vadd.f32 %v942, 1.0
    %v944 = vrcp.pop %v943
    %v945 = vmul.f32 1.0, %v944
    %v946 = vtanh.pop %v939
    %v947 = vmul.f32 %v945, %v857
    %949 = vrot.lane.b32.xlu0 %v946, 32
    %v950 = vpop.permute.xlu0 %949
    %v952 = vmul.f32 %v945, %v950
    %954 = vrot.lane.b32.xlu0 %v952, 32
    %v955 = vpop.permute.xlu0 %954
    %v957 = vadd.f32 %v947, %v955
    %v958 = vtanh.pop %v957
    %960 = vrot.lane.b32.xlu0 %v958, 32
    %v961 = vpop.permute.xlu0 %960
    %v963 = vmul.f32 %v945, %v961
    %965 = vrot.lane.b32.xlu0 %v363, 96
    %v966 = vpop.permute.xlu0 %965
    %968 = vrot.lane.b32.xlu0 %v563, 32
    %v969 = vpop.permute.xlu0 %968
    %972 = vrot.lane.b32.xlu0 %v763, 96
    %v973 = vpop.permute.xlu0 %972
    %976 = vrot.lane.b32.xlu0 %v963, 32
    %v977 = vpop.permute.xlu0 %976
    %v979 = vsel %vm165, %v266, %v966
    %vm980 = vcmask 523264
    %v981 = vsel %vm980, %v979, %v463
    %vm982 = vcmask 785408
    %v983 = vsel %vm982, %v981, %v969
    %v984 = vsel %vm165, %v666, %v973
    %v985 = vsel %vm980, %v984, %v863
    %v986 = vsel %vm982, %v985, %v977
    %v987 = vld [vmem:[#allocation8] sm:$0xff]
    %v988 = vld [vmem:[#allocation8 + $0x8] sm:$0xff]
    %v989 = vld [vmem:[#allocation8 + $0x10] sm:$0xff]
    %v990 = vld [vmem:[#allocation8 + $0x18] sm:$0xff]
    %v991 = vld [vmem:[#allocation8 + $0x20] sm:$0xff]
    %v992 = vld [vmem:[#allocation8 + $0x28] sm:$0xff]
    %v993 = vld [vmem:[#allocation8 + $0x30] sm:$0xff]
    %v994 = vld [vmem:[#allocation8 + $0x38] sm:$0xff]
    %v995 = vld [vmem:[#allocation8 + $0x40] sm:$0xff]
    %v996 = vld [vmem:[#allocation8 + $0x48] sm:$0xff]
    %v997 = vld [vmem:[#allocation8 + $0x50] sm:$0xff]
    %v998 = vld [vmem:[#allocation8 + $0x58] sm:$0xff]
    %v999 = vld [vmem:[#allocation8 + $0x60] sm:$0xff]
    %v1000 = vld [vmem:[#allocation8 + $0x68] sm:$0xff]
    %v1001 = vld [vmem:[#allocation8 + $0x70] sm:$0xff]
    %v1002 = vld [vmem:[#allocation8 + $0x78] sm:$0xff]
    %v1003 = vld [vmem:[#allocation8 + $0x80] sm:$0xff]
    %v1004 = vld [vmem:[#allocation8 + $0x88] sm:$0xff]
    %v1005 = vld [vmem:[#allocation8 + $0x90] sm:$0xff]
    %v1006 = vld [vmem:[#allocation8 + $0x98] sm:$0xff]
    %v1007 = vld [vmem:[#allocation8 + $0xa0] sm:$0xff]
    %v1008 = vld [vmem:[#allocation8 + $0xa8] sm:$0xff]
    %v1009 = vld [vmem:[#allocation8 + $0xb0] sm:$0xff]
    %v1010 = vld [vmem:[#allocation8 + $0xb8] sm:$0xff]
    %v1011 = vld [vmem:[#allocation8 + $0xc0] sm:$0xff]
    %v1012 = vld [vmem:[#allocation8 + $0xc8] sm:$0xff]
    %v1013 = vld [vmem:[#allocation8 + $0xd0] sm:$0xff]
    %v1014 = vld [vmem:[#allocation8 + $0xd8] sm:$0xff]
    %v1015 = vld [vmem:[#allocation8 + $0xe0] sm:$0xff]
    %v1016 = vld [vmem:[#allocation8 + $0xe8] sm:$0xff]
    %v1017 = vld [vmem:[#allocation8 + $0xf0] sm:$0xff]
    %v1018 = vld [vmem:[#allocation8 + $0xf8] sm:$0xff]
    %v1019 = vld [vmem:[%s5] sm:$0x1]
    %v1021 = vlaneseq
    %v1022 = vshrl.u32 %v1021, 7
    %v1023 = vsub.s32 0, %v1022
    %v1024 = vrot.slane %v1019, %v1023
    %1026 = vmatprep.subr.mxu0 0.0
    %1027 = vmatpush1.msra.mxu0 %v987
    %1028 = vmatprep.subr.mxu0 0.0
    %1029 = vmatpush1.msra.mxu0 %v988
    %1030 = vmatprep.subr.mxu0 0.0
    %1031 = vmatpush1.msra.mxu0 %v989
    %1032 = vmatprep.subr.mxu0 0.0
    %1033 = vmatpush1.msra.mxu0 %v990
    %1034 = vmatprep.subr.mxu0 0.0
    %1035 = vmatpush1.msra.mxu0 %v991
    %1036 = vmatprep.subr.mxu0 0.0
    %1037 = vmatpush1.msra.mxu0 %v992
    %1038 = vmatprep.subr.mxu0 0.0
    %1039 = vmatpush1.msra.mxu0 %v993
    %1040 = vmatprep.subr.mxu0 0.0
    %1041 = vmatpush1.msra.mxu0 %v994
    %1042 = vmatprep.subr.mxu0 0.0
    %1043 = vmatpush1.msra.mxu0 %v995
    %1044 = vmatprep.subr.mxu0 0.0
    %1045 = vmatpush1.msra.mxu0 %v996
    %1046 = vmatprep.subr.mxu0 0.0
    %1047 = vmatpush1.msra.mxu0 %v997
    %1048 = vmatprep.subr.mxu0 0.0
    %1049 = vmatpush1.msra.mxu0 %v998
    %1050 = vmatprep.subr.mxu0 0.0
    %1051 = vmatpush1.msra.mxu0 %v999
    %1052 = vmatprep.subr.mxu0 0.0
    %1053 = vmatpush1.msra.mxu0 %v1000
    %1054 = vmatprep.subr.mxu0 0.0
    %1055 = vmatpush1.msra.mxu0 %v1001
    %1056 = vmatprep.subr.mxu0 0.0
    %1057 = vmatpush1.msra.mxu0 %v1002
    %1058 = vmatprep.subr.mxu0 0.0
    %1059 = vmatpush1.msra.mxu0 %v1003
    %1060 = vmatprep.subr.mxu0 0.0
    %1061 = vmatpush1.msra.mxu0 %v1004
    %1062 = vmatprep.subr.mxu0 0.0
    %1063 = vmatpush1.msra.mxu0 %v1005
    %1064 = vmatprep.subr.mxu0 0.0
    %1065 = vmatpush1.msra.mxu0 %v1006
    %1066 = vmatprep.subr.mxu0 0.0
    %1067 = vmatpush1.msra.mxu0 %v1007
    %1068 = vmatprep.subr.mxu0 0.0
    %1069 = vmatpush1.msra.mxu0 %v1008
    %1070 = vmatprep.subr.mxu0 0.0
    %1071 = vmatpush1.msra.mxu0 %v1009
    %1072 = vmatprep.subr.mxu0 0.0
    %1073 = vmatpush1.msra.mxu0 %v1010
    %1074 = vmatprep.subr.mxu0 0.0
    %1075 = vmatpush1.msra.mxu0 %v1011
    %1076 = vmatprep.subr.mxu0 0.0
    %1077 = vmatpush1.msra.mxu0 %v1012
    %1078 = vmatprep.subr.mxu0 0.0
    %1079 = vmatpush1.msra.mxu0 %v1013
    %1080 = vmatprep.subr.mxu0 0.0
    %1081 = vmatpush1.msra.mxu0 %v1014
    %1082 = vmatprep.subr.mxu0 0.0
    %1083 = vmatpush1.msra.mxu0 %v1015
    %1084 = vmatprep.subr.mxu0 0.0
    %1085 = vmatpush1.msra.mxu0 %v1016
    %1086 = vmatprep.subr.mxu0 0.0
    %1087 = vmatpush1.msra.mxu0 %v1017
    %1088 = vmatprep.subr.mxu0 0.0
    %1089 = vmatpush1.msra.mxu0 %v1018
    %1090 = vmatprep.mubr.f32.mxu0 %v986
    %1091 = vmatmul.mubr.f32.gmra.mrb[0].mxu0 %v983
    %v1092 = vpop.f32.mrb[0].mxu0
    %v1093 = vadd.f32 %v1024, %v1092
    %v1094 = vpop.f32.mrb[0].mxu0
    %1095 = vdwg.mxu0
    %v1096 = vrot.slane %v1093, 4
    %v1097 = vadd.f32 %v1093, %v1096
    %v1098 = vrot.slane %v1097, 2
    %v1099 = vadd.f32 %v1097, %v1098
    %v1100 = vrot.slane %v1099, 1
    %v1101 = vadd.f32 %v1099, %v1100
    %v1102 = vrcp.pop 8.0
    %v1103 = vmul.f32 %v1101, %v1102
    %v1104 = vmul.f32 %v1093, %v1093
    %v1105 = vrot.slane %v1104, 4
    %v1106 = vadd.f32 %v1104, %v1105
    %v1107 = vrot.slane %v1106, 2
    %v1108 = vadd.f32 %v1106, %v1107
    %v1109 = vrot.slane %v1108, 1
    %v1110 = vadd.f32 %v1108, %v1109
    %v1111 = vmul.f32 %v1110, %v1102
    %v1112 = vmul.f32 %v1103, %v1103
    %v1113 = vsub.f32 %v1111, %v1112
    %v1114 = vsub.f32 %v1093, %v1103
    %v1115 = vadd.f32 %v1113, 1e-05
    %v1116 = vrsqrt.pop %v1115
    %v1117 = vmul.f32 %v1114, %v1116
    %1118 = vst [vmem:[#allocation10] sm:$0xff] %v1117
    // Predicated region
    $region42: #{tpu_custom_call.1} parent=1 // pred_check
      _
    $region43: #{tpu_custom_call.1} parent=1 // pred_check_branch
      %1120 = sbr.rel (0) target = $region45
    $region44: #{tpu_custom_call.1} parent=1 // pred_region
      %s1122 = ssub.s32 128, 128
      %1123 = vsyncadd [#allocation4], %s1122
      %s1125 = sshll.u32 [#allocation10], 4
      %s1126 = int_to_ptr.vmem [resolvable:$true] %s1125
      %1128 = dma.vmem_to_hbm [thread:$0]  %s1126, 128, %s6, [#allocation4]
    $region45: #{tpu_custom_call.1} parent=1 // pred_fallthru
      _
    // Predicated region
    $region46: #{tpu_custom_call.1} parent=1 // pred_check
      _
    $region47: #{tpu_custom_call.1} parent=1 // pred_check_branch
      %1130 = sbr.rel (0) target = $region49
    $region48: #{tpu_custom_call.1} parent=1 // pred_region
      %1131 = dma.done [#allocation4], 128
    $region49: #{tpu_custom_call.1} parent=1 // pred_fallthru
      _
    %1132 = vsyncpa [#allocation3], 1
    %1133 = vsyncpa [#allocation6], 1
    %1134 = vsyncpa [#allocation9], 1
    %1135 = vsyncpa [#allocation4], 1

</llo_original>
